<compile_context>
chip_gen: v5e
topology: v5e:2x2
jax: 0.10.0
libtpu: 0.0.40
codegen_flags: <defaults>
</compile_context>

<pallas_src>
import jax
import jax.numpy as jnp
from jax import lax
from jax.experimental import pallas as pl
from jax.experimental.pallas import tpu as pltpu


# ----------------------------- fused kernel ----------------------------------
def _convdown_fused_kernel(p_ref, pt_ref, pb_ref, w1_ref, b1_ref,
                           wdw_ref, wpw_ref, bpw_ref, o_ref, pad_ref):
    # p_ref  : (1, TR, Wo, 4C)   patchified input rows for this row tile
    # pt_ref : (1, 1,  Wo, 4C)   patch row above the tile (clamped at r==0)
    # pb_ref : (1, 1,  Wo, 4C)   patch row below the tile (clamped at r==last)
    # w1_ref : (4C, C)  b1_ref : (1, C)       -- 2x2/s2 conv as matmul
    # wdw_ref: (3, 3, C)                      -- depthwise taps
    # wpw_ref: (C, 2C)  bpw_ref: (1, 2C)      -- pointwise 1x1
    # o_ref  : (1, TR, Wo, 2C)
    # pad_ref: (TR+2, Wo+2, C)  VMEM scratch: zero-padded y1 neighborhood
    tr = o_ref.shape[1]
    wo = o_ref.shape[2]
    c = w1_ref.shape[1]

    r = pl.program_id(1)
    last = pl.num_programs(1) - 1

    w1 = w1_ref[...]
    b1 = b1_ref[...]

    def conv1_lrelu(p2d):                              # (M, 4C) -> (M, C), MXU
        y = jnp.dot(p2d, w1, preferred_element_type=jnp.float32) + b1
        return jnp.where(y > 0, y, 0.01 * y)           # LeakyReLU(0.01)

    y_main = conv1_lrelu(p_ref[0].reshape(tr * wo, 4 * c)).reshape(tr, wo, c)
    y_top = conv1_lrelu(pt_ref[0].reshape(wo, 4 * c)).reshape(1, wo, c)
    y_bot = conv1_lrelu(pb_ref[0].reshape(wo, 4 * c)).reshape(1, wo, c)

    # Halo rows outside the image must be the depthwise conv's zero padding.
    y_top = y_top * jnp.where(r == 0, 0.0, 1.0)
    y_bot = y_bot * jnp.where(r == last, 0.0, 1.0)

    # Assemble the zero-padded (TR+2, Wo+2, C) y1 tile in VMEM scratch.
    # (Zero columns rewritten every step: scratch persistence is per-core, so
    #  a "first iteration" guard would be wrong under megacore sharding.)
    zc = jnp.zeros((tr + 2, 1, c), jnp.float32)
    pad_ref[:, 0:1, :] = zc                             # left zero column
    pad_ref[:, wo + 1:wo + 2, :] = zc                   # right zero column
    pad_ref[0:1, 1:wo + 1, :] = y_top
    pad_ref[1:tr + 1, 1:wo + 1, :] = y_main
    pad_ref[tr + 1:tr + 2, 1:wo + 1, :] = y_bot

    # Depthwise 3x3 stencil (VPU): 9 shifted MACs, seeded with the first tap.
    wdw = wdw_ref[...]
    acc = pad_ref[0:tr, 0:wo, :] * wdw[0:1, 0:1, :]
    for ki in range(3):
        for kj in range(3):
            if ki == 0 and kj == 0:
                continue
            acc = acc + (pad_ref[ki:ki + tr, kj:kj + wo, :]
                         * wdw[ki:ki + 1, kj:kj + 1, :])

    # Pointwise 1x1 projection (MXU) + bias.
    y = jnp.dot(acc.reshape(tr * wo, c), wpw_ref[...],
                preferred_element_type=jnp.float32) + bpw_ref[...]
    o_ref[0] = y.reshape(tr, wo, 2 * c).astype(o_ref.dtype)


# ----------------------------- wrapper ----------------------------------------
def _pick_row_tile(ho, wo, c, budget_bytes):
    """Largest divisor of Ho whose main patch block fits the per-step budget.

    Prefers a multiple-of-8 divisor (sublane-aligned row slabs) when it is at
    least half the size of the best unconstrained divisor.
    """
    per_row = wo * 4 * c * 4                    # bytes per patch row (f32)
    cap = max(1, min(ho, budget_bytes // max(per_row, 1)))
    divs = [d for d in range(1, cap + 1) if ho % d == 0]
    best = divs[-1]
    m8 = [d for d in divs if d % 8 == 0]
    if m8 and 2 * m8[-1] >= best:
        best = m8[-1]
    return best


def conv_down(x_nchw, w1, b1, wdw, wpw, bpw, *, row_block_bytes=4 * 1024 * 1024):
    """x_nchw: (N, C, H, W) f32  ->  (N, 2C, H//2, W//2) f32."""
    n, c, h, w = x_nchw.shape
    ho, wo = h // 2, w // 2
    if (h % 2) or (w % 2):                      # match PyTorch floor behaviour
        x_nchw = x_nchw[:, :, :2 * ho, :2 * wo]

    # Single HBM layout transform: NCHW -> patchified channels-last
    # (N,C,H,W) -> (N,C,Ho,2,Wo,2) -> (N,Ho,Wo,2,2,C) -> (N,Ho,Wo,4C)
    patches = jnp.transpose(x_nchw.reshape(n, c, ho, 2, wo, 2),
                            (0, 2, 4, 3, 5, 1)).reshape(n, ho, wo, 4 * c)

    w1_mat = w1.reshape(4 * c, c)               # (kh,kw,ci,co) -> (4C, C)
    b1_row = b1.reshape(1, c)
    bpw_row = bpw.reshape(1, 2 * c)

    tr = _pick_row_tile(ho, wo, c, row_block_bytes)
    n_rt = ho // tr

    def main_map(b, r):
        return (b, r, 0, 0)

    def top_map(b, r):                          # y1 row (r*tr - 1), clamped
        return (b, jnp.maximum(r * tr - 1, 0), 0, 0)

    def bot_map(b, r):                          # y1 row ((r+1)*tr), clamped
        return (b, jnp.minimum((r + 1) * tr, ho - 1), 0, 0)

    out_nhwc = pl.pallas_call(
        _convdown_fused_kernel,
        out_shape=jax.ShapeDtypeStruct((n, ho, wo, 2 * c), jnp.float32),
        grid=(n, n_rt),
        in_specs=[
            pl.BlockSpec((1, tr, wo, 4 * c), main_map),
            pl.BlockSpec((1, 1, wo, 4 * c), top_map),
            pl.BlockSpec((1, 1, wo, 4 * c), bot_map),
            pl.BlockSpec((4 * c, c), lambda b, r: (0, 0)),
            pl.BlockSpec((1, c), lambda b, r: (0, 0)),
            pl.BlockSpec((3, 3, c), lambda b, r: (0, 0, 0)),
            pl.BlockSpec((c, 2 * c), lambda b, r: (0, 0)),
            pl.BlockSpec((1, 2 * c), lambda b, r: (0, 0)),
        ],
        out_specs=pl.BlockSpec((1, tr, wo, 2 * c), main_map),
        scratch_shapes=[pltpu.VMEM((tr + 2, wo + 2, c), jnp.float32)],
        compiler_params=pltpu.CompilerParams(
            dimension_semantics=("parallel", "parallel"),
            vmem_limit_bytes=48 * 1024 * 1024,
        ),
    )(patches, patches, patches, w1_mat, b1_row, wdw, wpw, bpw_row)

    # Back to PyTorch NCHW layout.
    return jnp.transpose(out_nhwc, (0, 3, 1, 2))


# ----------------------------- pure-JAX reference -----------------------------
def conv_down_ref(x_nchw, w1, b1, wdw, wpw, bpw):
    c = x_nchw.shape[1]
    dn = ("NCHW", "OIHW", "NCHW")
    w1_oihw = jnp.transpose(w1, (3, 2, 0, 1))                 # (co, ci, 2, 2)
    y = lax.conv_general_dilated(x_nchw, w1_oihw, (2, 2), "VALID",
                                 dimension_numbers=dn)
    y = y + b1[None, :, None, None]
    y = jnp.where(y > 0, y, 0.01 * y)
    wdw_oihw = jnp.transpose(wdw, (2, 0, 1))[:, None, :, :]   # (C, 1, 3, 3)
    y = lax.conv_general_dilated(y, wdw_oihw, (1, 1), "SAME",
                                 dimension_numbers=dn, feature_group_count=c)
    wpw_oihw = wpw.T[:, :, None, None]                        # (2C, C, 1, 1)
    y = lax.conv_general_dilated(y, wpw_oihw, (1, 1), "VALID",
                                 dimension_numbers=dn)
    return y + bpw[None, :, None, None]


if __name__ == "__main__":
    key = jax.random.PRNGKey(0)
    k1, k2, k3, k4, k5, k6 = jax.random.split(key, 6)

    N, C, H, W = 2, 4, 16, 16
    # Deterministic synthetic parameters (shapes from the module's __init__).
    w1 = jax.random.normal(k1, (2, 2, C, C), jnp.float32) * 0.1   # conv 2x2 s2
    b1 = jax.random.normal(k2, (C,), jnp.float32) * 0.1
    wdw = jax.random.normal(k3, (3, 3, C), jnp.float32) * 0.1     # depthwise 3x3
    wpw = jax.random.normal(k4, (C, 2 * C), jnp.float32) * 0.1    # pointwise 1x1
    bpw = jax.random.normal(k5, (2 * C,), jnp.float32) * 0.1
    x = jax.random.normal(k6, (N, C, H, W), jnp.float32)

    out = jax.block_until_ready(conv_down(x, w1, b1, wdw, wpw, bpw))
    ref = jax.block_until_ready(conv_down_ref(x, w1, b1, wdw, wpw, bpw))

    assert out.shape == (N, 2 * C, H // 2, W // 2), out.shape
    assert jnp.allclose(out, ref, atol=1e-4, rtol=1e-4), float(jnp.max(jnp.abs(out - ref)))

    print("KERNEL_OK")
</pallas_src>

<mosaic_0001>
module attributes {stable_mosaic.version = 11 : i64} {
  func.func @_convdown_fused_kernel(%arg0: i32, %arg1: i32, %arg2: memref<1x8x8x16xf32, #tpu.memory_space<vmem>>, %arg3: memref<1x1x8x16xf32, #tpu.memory_space<vmem>>, %arg4: memref<1x1x8x16xf32, #tpu.memory_space<vmem>>, %arg5: memref<16x4xf32, #tpu.memory_space<vmem>>, %arg6: memref<1x4xf32, #tpu.memory_space<vmem>>, %arg7: memref<3x3x4xf32, #tpu.memory_space<vmem>>, %arg8: memref<4x8xf32, #tpu.memory_space<vmem>>, %arg9: memref<1x8xf32, #tpu.memory_space<vmem>>, %arg10: memref<1x8x8x8xf32, #tpu.memory_space<vmem>>, %arg11: memref<10x10x4xf32, #tpu.memory_space<vmem>>) attributes {dimension_semantics = [#tpu.dimension_semantics<parallel>, #tpu.dimension_semantics<parallel>], iteration_bounds = array<i64: 2, 1>, scalar_prefetch = 0 : i64, scratch_operands = 1 : i64, tpu.core_type = #tpu.core_type<tc>, window_params = [{transform_indices = @transform_0, window_bounds = array<i64: 1, 8, 8, 16>}, {transform_indices = @transform_1, window_bounds = array<i64: 1, 1, 8, 16>}, {transform_indices = @transform_2, window_bounds = array<i64: 1, 1, 8, 16>}, {pipeline_mode = #tpu.pipeline_mode<synchronous>, transform_indices = @transform_3, window_bounds = array<i64: 16, 4>}, {pipeline_mode = #tpu.pipeline_mode<synchronous>, transform_indices = @transform_4, window_bounds = array<i64: 1, 4>}, {pipeline_mode = #tpu.pipeline_mode<synchronous>, transform_indices = @transform_5, window_bounds = array<i64: 3, 3, 4>}, {pipeline_mode = #tpu.pipeline_mode<synchronous>, transform_indices = @transform_6, window_bounds = array<i64: 4, 8>}, {pipeline_mode = #tpu.pipeline_mode<synchronous>, transform_indices = @transform_7, window_bounds = array<i64: 1, 8>}, {transform_indices = @transform_8, window_bounds = array<i64: 1, 8, 8, 8>}]} {
    %c0 = arith.constant 0 : index
    %c0_0 = arith.constant 0 : index
    %0 = vector.load %arg5[%c0, %c0_0] : memref<16x4xf32, #tpu.memory_space<vmem>>, vector<16x4xf32>
    %c0_1 = arith.constant 0 : index
    %c0_2 = arith.constant 0 : index
    %1 = vector.load %arg6[%c0_1, %c0_2] : memref<1x4xf32, #tpu.memory_space<vmem>>, vector<1x4xf32>
    %c0_3 = arith.constant 0 : index
    %c0_4 = arith.constant 0 : index
    %c0_5 = arith.constant 0 : index
    %c0_6 = arith.constant 0 : index
    %2 = vector.load %arg2[%c0_3, %c0_4, %c0_5, %c0_6] : memref<1x8x8x16xf32, #tpu.memory_space<vmem>>, vector<1x8x8x16xf32>
    %3 = vector.shape_cast %2 : vector<1x8x8x16xf32> to vector<8x8x16xf32>
    %4 = vector.shape_cast %3 : vector<8x8x16xf32> to vector<64x16xf32>
    %cst = arith.constant dense<0.000000e+00> : vector<64x4xf32>
    %5 = tpu.matmul %4, %0, %cst {dimension_numbers = #tpu.dot_dimension_numbers<[1], [0], [0], [1], [0, 0, 1, 1], [], []>} : vector<64x16xf32>, vector<16x4xf32>, vector<64x4xf32> -> vector<64x4xf32>
    %6 = vector.broadcast %1 : vector<1x4xf32> to vector<64x4xf32>
    %7 = arith.addf %5, %6 : vector<64x4xf32>
    %cst_7 = arith.constant 0.000000e+00 : f32
    %8 = vector.broadcast %cst_7 : f32 to vector<64x4xf32>
    %9 = arith.cmpf ogt, %7, %8 : vector<64x4xf32>
    %cst_8 = arith.constant 0.00999999977 : f32
    %10 = vector.broadcast %cst_8 : f32 to vector<64x4xf32>
    %11 = arith.mulf %10, %7 : vector<64x4xf32>
    %12 = arith.select %9, %7, %11 : vector<64x4xi1>, vector<64x4xf32>
    %13 = vector.shape_cast %12 : vector<64x4xf32> to vector<8x8x4xf32>
    %c0_9 = arith.constant 0 : index
    %c0_10 = arith.constant 0 : index
    %c0_11 = arith.constant 0 : index
    %c0_12 = arith.constant 0 : index
    %14 = vector.load %arg3[%c0_9, %c0_10, %c0_11, %c0_12] : memref<1x1x8x16xf32, #tpu.memory_space<vmem>>, vector<1x1x8x16xf32>
    %15 = vector.shape_cast %14 : vector<1x1x8x16xf32> to vector<1x8x16xf32>
    %16 = vector.shape_cast %15 : vector<1x8x16xf32> to vector<8x16xf32>
    %cst_13 = arith.constant dense<0.000000e+00> : vector<8x4xf32>
    %17 = tpu.matmul %16, %0, %cst_13 {dimension_numbers = #tpu.dot_dimension_numbers<[1], [0], [0], [1], [0, 0, 1, 1], [], []>} : vector<8x16xf32>, vector<16x4xf32>, vector<8x4xf32> -> vector<8x4xf32>
    %18 = vector.broadcast %1 : vector<1x4xf32> to vector<8x4xf32>
    %19 = arith.addf %17, %18 : vector<8x4xf32>
    %cst_14 = arith.constant 0.000000e+00 : f32
    %20 = vector.broadcast %cst_14 : f32 to vector<8x4xf32>
    %21 = arith.cmpf ogt, %19, %20 : vector<8x4xf32>
    %cst_15 = arith.constant 0.00999999977 : f32
    %22 = vector.broadcast %cst_15 : f32 to vector<8x4xf32>
    %23 = arith.mulf %22, %19 : vector<8x4xf32>
    %24 = arith.select %21, %19, %23 : vector<8x4xi1>, vector<8x4xf32>
    %25 = vector.shape_cast %24 : vector<8x4xf32> to vector<1x8x4xf32>
    %c0_16 = arith.constant 0 : index
    %c0_17 = arith.constant 0 : index
    %c0_18 = arith.constant 0 : index
    %c0_19 = arith.constant 0 : index
    %26 = vector.load %arg4[%c0_16, %c0_17, %c0_18, %c0_19] : memref<1x1x8x16xf32, #tpu.memory_space<vmem>>, vector<1x1x8x16xf32>
    %27 = vector.shape_cast %26 : vector<1x1x8x16xf32> to vector<1x8x16xf32>
    %28 = vector.shape_cast %27 : vector<1x8x16xf32> to vector<8x16xf32>
    %cst_20 = arith.constant dense<0.000000e+00> : vector<8x4xf32>
    %29 = tpu.matmul %28, %0, %cst_20 {dimension_numbers = #tpu.dot_dimension_numbers<[1], [0], [0], [1], [0, 0, 1, 1], [], []>} : vector<8x16xf32>, vector<16x4xf32>, vector<8x4xf32> -> vector<8x4xf32>
    %30 = vector.broadcast %1 : vector<1x4xf32> to vector<8x4xf32>
    %31 = arith.addf %29, %30 : vector<8x4xf32>
    %cst_21 = arith.constant 0.000000e+00 : f32
    %32 = vector.broadcast %cst_21 : f32 to vector<8x4xf32>
    %33 = arith.cmpf ogt, %31, %32 : vector<8x4xf32>
    %cst_22 = arith.constant 0.00999999977 : f32
    %34 = vector.broadcast %cst_22 : f32 to vector<8x4xf32>
    %35 = arith.mulf %34, %31 : vector<8x4xf32>
    %36 = arith.select %33, %31, %35 : vector<8x4xi1>, vector<8x4xf32>
    %37 = vector.shape_cast %36 : vector<8x4xf32> to vector<1x8x4xf32>
    %c0_i32 = arith.constant 0 : i32
    %38 = arith.cmpi eq, %arg1, %c0_i32 : i32
    %cst_23 = arith.constant 0.000000e+00 : f32
    %cst_24 = arith.constant 1.000000e+00 : f32
    %39 = arith.select %38, %cst_23, %cst_24 : f32
    %40 = vector.broadcast %39 : f32 to vector<1x8x4xf32>
    %41 = arith.mulf %25, %40 : vector<1x8x4xf32>
    %c0_i32_25 = arith.constant 0 : i32
    %42 = arith.cmpi eq, %arg1, %c0_i32_25 : i32
    %cst_26 = arith.constant 0.000000e+00 : f32
    %cst_27 = arith.constant 1.000000e+00 : f32
    %43 = arith.select %42, %cst_26, %cst_27 : f32
    %44 = vector.broadcast %43 : f32 to vector<1x8x4xf32>
    %45 = arith.mulf %37, %44 : vector<1x8x4xf32>
    %cst_28 = arith.constant 0.000000e+00 : f32
    %46 = vector.broadcast %cst_28 : f32 to vector<10x1x4xf32>
    %c0_29 = arith.constant 0 : index
    %c0_30 = arith.constant 0 : index
    %c0_31 = arith.constant 0 : index
    %47 = vector.load %arg11[%c0_29, %c0_30, %c0_31] : memref<10x10x4xf32, #tpu.memory_space<vmem>>, vector<10x1x4xf32>
    tpu.vector_store %arg11[%c0_29, %c0_30, %c0_31], %46 {strides = array<i32>} : memref<10x10x4xf32, #tpu.memory_space<vmem>>, vector<10x1x4xf32>,
    %c0_32 = arith.constant 0 : index
    %c9 = arith.constant 9 : index
    %c0_33 = arith.constant 0 : index
    %48 = vector.load %arg11[%c0_32, %c9, %c0_33] : memref<10x10x4xf32, #tpu.memory_space<vmem>>, vector<10x1x4xf32>
    tpu.vector_store %arg11[%c0_32, %c9, %c0_33], %46 {strides = array<i32>} : memref<10x10x4xf32, #tpu.memory_space<vmem>>, vector<10x1x4xf32>,
    %c0_34 = arith.constant 0 : index
    %c1 = arith.constant 1 : index
    %c0_35 = arith.constant 0 : index
    %49 = vector.load %arg11[%c0_34, %c1, %c0_35] : memref<10x10x4xf32, #tpu.memory_space<vmem>>, vector<1x8x4xf32>
    tpu.vector_store %arg11[%c0_34, %c1, %c0_35], %41 {strides = array<i32>} : memref<10x10x4xf32, #tpu.memory_space<vmem>>, vector<1x8x4xf32>,
    %c1_36 = arith.constant 1 : index
    %c1_37 = arith.constant 1 : index
    %c0_38 = arith.constant 0 : index
    %50 = vector.load %arg11[%c1_36, %c1_37, %c0_38] : memref<10x10x4xf32, #tpu.memory_space<vmem>>, vector<8x8x4xf32>
    tpu.vector_store %arg11[%c1_36, %c1_37, %c0_38], %13 {strides = array<i32>} : memref<10x10x4xf32, #tpu.memory_space<vmem>>, vector<8x8x4xf32>,
    %c9_39 = arith.constant 9 : index
    %c1_40 = arith.constant 1 : index
    %c0_41 = arith.constant 0 : index
    %51 = vector.load %arg11[%c9_39, %c1_40, %c0_41] : memref<10x10x4xf32, #tpu.memory_space<vmem>>, vector<1x8x4xf32>
    tpu.vector_store %arg11[%c9_39, %c1_40, %c0_41], %45 {strides = array<i32>} : memref<10x10x4xf32, #tpu.memory_space<vmem>>, vector<1x8x4xf32>,
    %c0_42 = arith.constant 0 : index
    %c0_43 = arith.constant 0 : index
    %c0_44 = arith.constant 0 : index
    %52 = vector.load %arg7[%c0_42, %c0_43, %c0_44] : memref<3x3x4xf32, #tpu.memory_space<vmem>>, vector<3x3x4xf32>
    %c0_45 = arith.constant 0 : index
    %c0_46 = arith.constant 0 : index
    %c0_47 = arith.constant 0 : index
    %53 = vector.load %arg11[%c0_45, %c0_46, %c0_47] : memref<10x10x4xf32, #tpu.memory_space<vmem>>, vector<8x8x4xf32>
    %54 = vector.extract_strided_slice %52 {offsets = [0, 0, 0], sizes = [1, 1, 4], strides = [1, 1, 1]} : vector<3x3x4xf32> to vector<1x1x4xf32>
    %55 = vector.broadcast %54 : vector<1x1x4xf32> to vector<8x8x4xf32>
    %56 = arith.mulf %53, %55 : vector<8x8x4xf32>
    %c0_48 = arith.constant 0 : index
    %c1_49 = arith.constant 1 : index
    %c0_50 = arith.constant 0 : index
    %57 = vector.load %arg11[%c0_48, %c1_49, %c0_50] : memref<10x10x4xf32, #tpu.memory_space<vmem>>, vector<8x8x4xf32>
    %58 = vector.extract_strided_slice %52 {offsets = [0, 1, 0], sizes = [1, 1, 4], strides = [1, 1, 1]} : vector<3x3x4xf32> to vector<1x1x4xf32>
    %59 = vector.broadcast %58 : vector<1x1x4xf32> to vector<8x8x4xf32>
    %60 = arith.mulf %57, %59 : vector<8x8x4xf32>
    %61 = arith.addf %56, %60 : vector<8x8x4xf32>
    %c0_51 = arith.constant 0 : index
    %c2 = arith.constant 2 : index
    %c0_52 = arith.constant 0 : index
    %62 = vector.load %arg11[%c0_51, %c2, %c0_52] : memref<10x10x4xf32, #tpu.memory_space<vmem>>, vector<8x8x4xf32>
    %63 = vector.extract_strided_slice %52 {offsets = [0, 2, 0], sizes = [1, 1, 4], strides = [1, 1, 1]} : vector<3x3x4xf32> to vector<1x1x4xf32>
    %64 = vector.broadcast %63 : vector<1x1x4xf32> to vector<8x8x4xf32>
    %65 = arith.mulf %62, %64 : vector<8x8x4xf32>
    %66 = arith.addf %61, %65 : vector<8x8x4xf32>
    %c1_53 = arith.constant 1 : index
    %c0_54 = arith.constant 0 : index
    %c0_55 = arith.constant 0 : index
    %67 = vector.load %arg11[%c1_53, %c0_54, %c0_55] : memref<10x10x4xf32, #tpu.memory_space<vmem>>, vector<8x8x4xf32>
    %68 = vector.extract_strided_slice %52 {offsets = [1, 0, 0], sizes = [1, 1, 4], strides = [1, 1, 1]} : vector<3x3x4xf32> to vector<1x1x4xf32>
    %69 = vector.broadcast %68 : vector<1x1x4xf32> to vector<8x8x4xf32>
    %70 = arith.mulf %67, %69 : vector<8x8x4xf32>
    %71 = arith.addf %66, %70 : vector<8x8x4xf32>
    %c1_56 = arith.constant 1 : index
    %c1_57 = arith.constant 1 : index
    %c0_58 = arith.constant 0 : index
    %72 = vector.load %arg11[%c1_56, %c1_57, %c0_58] : memref<10x10x4xf32, #tpu.memory_space<vmem>>, vector<8x8x4xf32>
    %73 = vector.extract_strided_slice %52 {offsets = [1, 1, 0], sizes = [1, 1, 4], strides = [1, 1, 1]} : vector<3x3x4xf32> to vector<1x1x4xf32>
    %74 = vector.broadcast %73 : vector<1x1x4xf32> to vector<8x8x4xf32>
    %75 = arith.mulf %72, %74 : vector<8x8x4xf32>
    %76 = arith.addf %71, %75 : vector<8x8x4xf32>
    %c1_59 = arith.constant 1 : index
    %c2_60 = arith.constant 2 : index
    %c0_61 = arith.constant 0 : index
    %77 = vector.load %arg11[%c1_59, %c2_60, %c0_61] : memref<10x10x4xf32, #tpu.memory_space<vmem>>, vector<8x8x4xf32>
    %78 = vector.extract_strided_slice %52 {offsets = [1, 2, 0], sizes = [1, 1, 4], strides = [1, 1, 1]} : vector<3x3x4xf32> to vector<1x1x4xf32>
    %79 = vector.broadcast %78 : vector<1x1x4xf32> to vector<8x8x4xf32>
    %80 = arith.mulf %77, %79 : vector<8x8x4xf32>
    %81 = arith.addf %76, %80 : vector<8x8x4xf32>
    %c2_62 = arith.constant 2 : index
    %c0_63 = arith.constant 0 : index
    %c0_64 = arith.constant 0 : index
    %82 = vector.load %arg11[%c2_62, %c0_63, %c0_64] : memref<10x10x4xf32, #tpu.memory_space<vmem>>, vector<8x8x4xf32>
    %83 = vector.extract_strided_slice %52 {offsets = [2, 0, 0], sizes = [1, 1, 4], strides = [1, 1, 1]} : vector<3x3x4xf32> to vector<1x1x4xf32>
    %84 = vector.broadcast %83 : vector<1x1x4xf32> to vector<8x8x4xf32>
    %85 = arith.mulf %82, %84 : vector<8x8x4xf32>
    %86 = arith.addf %81, %85 : vector<8x8x4xf32>
    %c2_65 = arith.constant 2 : index
    %c1_66 = arith.constant 1 : index
    %c0_67 = arith.constant 0 : index
    %87 = vector.load %arg11[%c2_65, %c1_66, %c0_67] : memref<10x10x4xf32, #tpu.memory_space<vmem>>, vector<8x8x4xf32>
    %88 = vector.extract_strided_slice %52 {offsets = [2, 1, 0], sizes = [1, 1, 4], strides = [1, 1, 1]} : vector<3x3x4xf32> to vector<1x1x4xf32>
    %89 = vector.broadcast %88 : vector<1x1x4xf32> to vector<8x8x4xf32>
    %90 = arith.mulf %87, %89 : vector<8x8x4xf32>
    %91 = arith.addf %86, %90 : vector<8x8x4xf32>
    %c2_68 = arith.constant 2 : index
    %c2_69 = arith.constant 2 : index
    %c0_70 = arith.constant 0 : index
    %92 = vector.load %arg11[%c2_68, %c2_69, %c0_70] : memref<10x10x4xf32, #tpu.memory_space<vmem>>, vector<8x8x4xf32>
    %93 = vector.extract_strided_slice %52 {offsets = [2, 2, 0], sizes = [1, 1, 4], strides = [1, 1, 1]} : vector<3x3x4xf32> to vector<1x1x4xf32>
    %94 = vector.broadcast %93 : vector<1x1x4xf32> to vector<8x8x4xf32>
    %95 = arith.mulf %92, %94 : vector<8x8x4xf32>
    %96 = arith.addf %91, %95 : vector<8x8x4xf32>
    %97 = vector.shape_cast %96 : vector<8x8x4xf32> to vector<64x4xf32>
    %c0_71 = arith.constant 0 : index
    %c0_72 = arith.constant 0 : index
    %98 = vector.load %arg8[%c0_71, %c0_72] : memref<4x8xf32, #tpu.memory_space<vmem>>, vector<4x8xf32>
    %cst_73 = arith.constant dense<0.000000e+00> : vector<64x8xf32>
    %99 = tpu.matmul %97, %98, %cst_73 {dimension_numbers = #tpu.dot_dimension_numbers<[1], [0], [0], [1], [0, 0, 1, 1], [], []>} : vector<64x4xf32>, vector<4x8xf32>, vector<64x8xf32> -> vector<64x8xf32>
    %c0_74 = arith.constant 0 : index
    %c0_75 = arith.constant 0 : index
    %100 = vector.load %arg9[%c0_74, %c0_75] : memref<1x8xf32, #tpu.memory_space<vmem>>, vector<1x8xf32>
    %101 = vector.broadcast %100 : vector<1x8xf32> to vector<64x8xf32>
    %102 = arith.addf %99, %101 : vector<64x8xf32>
    %103 = vector.shape_cast %102 : vector<64x8xf32> to vector<8x8x8xf32>
    %c0_76 = arith.constant 0 : index
    %c0_77 = arith.constant 0 : index
    %c0_78 = arith.constant 0 : index
    %c0_79 = arith.constant 0 : index
    %104 = vector.load %arg10[%c0_76, %c0_77, %c0_78, %c0_79] : memref<1x8x8x8xf32, #tpu.memory_space<vmem>>, vector<1x8x8x8xf32>
    %105 = vector.shape_cast %104 : vector<1x8x8x8xf32> to vector<8x8x8xf32>
    %106 = vector.shape_cast %103 : vector<8x8x8xf32> to vector<1x8x8x8xf32>
    tpu.vector_store %arg10[%c0_76, %c0_77, %c0_78, %c0_79], %106 {strides = array<i32>} : memref<1x8x8x8xf32, #tpu.memory_space<vmem>>, vector<1x8x8x8xf32>,
    return
  }
  func.func @transform_0(%arg0: i32, %arg1: i32) -> (i32, i32, i32, i32) {
    %c0_i32 = arith.constant 0 : i32
    %c0_i32_0 = arith.constant 0 : i32
    %c0_i32_1 = arith.constant 0 : i32
    return %arg0, %arg1, %c0_i32, %c0_i32_0 : i32, i32, i32, i32
  }
  func.func @transform_1(%arg0: i32, %arg1: i32) -> (i32, i32, i32, i32) {
    %c8_i32 = arith.constant 8 : i32
    %0 = arith.muli %arg1, %c8_i32 : i32
    %c1_i32 = arith.constant 1 : i32
    %1 = arith.subi %0, %c1_i32 : i32
    %c0_i32 = arith.constant 0 : i32
    %2 = arith.maxsi %1, %c0_i32 : i32
    %c0_i32_0 = arith.constant 0 : i32
    %c0_i32_1 = arith.constant 0 : i32
    %c0_i32_2 = arith.constant 0 : i32
    return %arg0, %2, %c0_i32_0, %c0_i32_1 : i32, i32, i32, i32
  }
  func.func @transform_2(%arg0: i32, %arg1: i32) -> (i32, i32, i32, i32) {
    %c1_i32 = arith.constant 1 : i32
    %0 = arith.addi %arg1, %c1_i32 : i32
    %c8_i32 = arith.constant 8 : i32
    %1 = arith.muli %0, %c8_i32 : i32
    %c7_i32 = arith.constant 7 : i32
    %2 = arith.minsi %1, %c7_i32 : i32
    %c0_i32 = arith.constant 0 : i32
    %c0_i32_0 = arith.constant 0 : i32
    %c0_i32_1 = arith.constant 0 : i32
    return %arg0, %2, %c0_i32, %c0_i32_0 : i32, i32, i32, i32
  }
  func.func @transform_3(%arg0: i32, %arg1: i32) -> (i32, i32) {
    %c0_i32 = arith.constant 0 : i32
    %c0_i32_0 = arith.constant 0 : i32
    %c0_i32_1 = arith.constant 0 : i32
    return %c0_i32, %c0_i32_0 : i32, i32
  }
  func.func @transform_4(%arg0: i32, %arg1: i32) -> (i32, i32) {
    %c0_i32 = arith.constant 0 : i32
    %c0_i32_0 = arith.constant 0 : i32
    %c0_i32_1 = arith.constant 0 : i32
    return %c0_i32, %c0_i32_0 : i32, i32
  }
  func.func @transform_5(%arg0: i32, %arg1: i32) -> (i32, i32, i32) {
    %c0_i32 = arith.constant 0 : i32
    %c0_i32_0 = arith.constant 0 : i32
    %c0_i32_1 = arith.constant 0 : i32
    %c0_i32_2 = arith.constant 0 : i32
    return %c0_i32, %c0_i32_0, %c0_i32_1 : i32, i32, i32
  }
  func.func @transform_6(%arg0: i32, %arg1: i32) -> (i32, i32) {
    %c0_i32 = arith.constant 0 : i32
    %c0_i32_0 = arith.constant 0 : i32
    %c0_i32_1 = arith.constant 0 : i32
    return %c0_i32, %c0_i32_0 : i32, i32
  }
  func.func @transform_7(%arg0: i32, %arg1: i32) -> (i32, i32) {
    %c0_i32 = arith.constant 0 : i32
    %c0_i32_0 = arith.constant 0 : i32
    %c0_i32_1 = arith.constant 0 : i32
    return %c0_i32, %c0_i32_0 : i32, i32
  }
  func.func @transform_8(%arg0: i32, %arg1: i32) -> (i32, i32, i32, i32) {
    %c0_i32 = arith.constant 0 : i32
    %c0_i32_0 = arith.constant 0 : i32
    %c0_i32_1 = arith.constant 0 : i32
    return %arg0, %arg1, %c0_i32, %c0_i32_0 : i32, i32, i32, i32
  }
}

</mosaic_0001>

<llo_original>
// kernel: tpu_custom_call.1
$region0: #{tpu_custom_call.1}
  #allocation0 [shape = 'u32[]', space=smem, size = 0x4, offset = 0x4, fixed_abs, tag = 'smem constant byte address 0x4 - core index']
  #allocation1 [shape = 'u32[72,128]{1,0:T(1,128)}', space=vmem, size = 0x9000, scoped, tag = 'internal scratch']
  #allocation2 [shape = 'f32[10,10,4]{2,1,0:T(8,128)}', space=vmem, size = 0x14000, scoped, tag = 'scratch operand']
  %s0 = inlined_call_operand.hbm [shape: f32[2,8,8,16], index: 0, kind: input, shape index: {}]
  %s1 = inlined_call_operand.hbm [shape: f32[2,8,8,16], index: 1, kind: input, shape index: {}]
  %s2 = inlined_call_operand.hbm [shape: f32[2,8,8,16], index: 2, kind: input, shape index: {}]
  %s3 = inlined_call_operand.vmem [shape: f32[16,4], index: 3, kind: input, shape index: {}]
  %s4 = inlined_call_operand.vmem [shape: f32[1,4], index: 4, kind: input, shape index: {}]
  %s5 = inlined_call_operand.vmem [shape: f32[3,3,4], index: 5, kind: input, shape index: {}]
  %s6 = inlined_call_operand.vmem [shape: f32[4,8], index: 6, kind: input, shape index: {}]
  %s7 = inlined_call_operand.vmem [shape: f32[1,8], index: 7, kind: input, shape index: {}]
  %s8 = inlined_call_operand.hbm [shape: f32[2,8,8,8], index: 8, kind: output, shape index: {}]
  %s9 = sld [smem:[#allocation0]]
  $region77: #{tpu_custom_call.1} parent=0
    _
  %s11 = ssub.s32 1, %s9
  %s12 = scalar_select 0, %s11, %s9
  $region1: #{tpu_custom_call.1} parent=0
    #allocation3 [shape = 'u8[65536]{0}', space=vmem, size = 0x10000, scoped, tag = 'input window, operand 0']
    #allocation4 [shape = 's32[2]{0}', space=sflag, size = 0x8, scoped, tag = 'scoped memory for tpu_custom_call.1']
    #allocation5 [shape = 's32[2]{0}', space=sflag, size = 0x8, scoped, tag = 'scoped memory for tpu_custom_call.1']
    #allocation6 [shape = 'u8[8192]{0}', space=vmem, size = 0x2000, scoped, tag = 'input window, operand 1']
    #allocation7 [shape = 's32[2]{0}', space=sflag, size = 0x8, scoped, tag = 'scoped memory for tpu_custom_call.1']
    #allocation8 [shape = 'u8[8192]{0}', space=vmem, size = 0x2000, scoped, tag = 'input window, operand 2']
    #allocation9 [shape = 'u8[65536]{0}', space=vmem, size = 0x10000, scoped, tag = 'output window, operand 0']
    %13 = vsyncpa [#allocation4], 0
    %s14 = scalar_lea.sflag [#allocation4], 1
    %15 = vsyncpa %s14, 0
    %16 = vsyncpa [#allocation7], 0
    %s17 = scalar_lea.sflag [#allocation7], 1
    %18 = vsyncpa %s17, 0
    %19 = vsyncpa [#allocation5], 0
    %s20 = scalar_lea.sflag [#allocation5], 1
    %21 = vsyncpa %s20, 0
    loop: start=0, step=1, limit=4
    $region2: #{tpu_custom_call.1} parent=1 // loop_pre_header
      _
    $region3: #{tpu_custom_call.1} parent=1 // loop_header
      %s23 = sphi 0, %s27
      %p24 = scmp.ge.s32.totalorder %s23, 4
      %s30 = sphi 0, %s42
      %s31 = sphi 0, %s38
      %s32 = sphi 0, %s30
      %s33 = sphi 0, %s31
      %s34 = sphi 0, %s32
      %s35 = sphi 0, %s33
      %s47 = sphi 0, %s49
      %s50 = sphi 0, %s47
      %s51 = sphi 0, %s50
      %s67 = sphi 0, %s51
      %s83 = sphi 0, %s85
      %s86 = sphi 0, %s83
      %s87 = sphi 0, %s86
      %s103 = sphi 0, %s87
      %s119 = sphi 0, %s121
      %s122 = sphi 0, %s119
      %s123 = sphi 0, %s122
      %s139 = sphi 0, %s123
      %s143 = sphi 0, %s143
      %s145 = sphi 0, %s143
      %s146 = sphi 0, %s145
      %s160 = sphi 0, %s146
      %s164 = sphi 0, %s164
      %s166 = sphi 0, %s164
      %s167 = sphi 0, %s166
      %s181 = sphi 0, %s167
      %s185 = sphi 0, %s185
      %s187 = sphi 0, %s185
      %s188 = sphi 0, %s187
      %s202 = sphi 0, %s188
      %s206 = sphi 0, %s206
      %s208 = sphi 0, %s206
      %s209 = sphi 0, %s208
      %s223 = sphi 0, %s209
      %s227 = sphi 0, %s227
      %s229 = sphi 0, %s227
      %s230 = sphi 0, %s229
      %s244 = sphi 0, %s230
      %s252 = sphi 0, %s254
      %s255 = sphi 0, %s252
      %s256 = sphi 0, %s255
      %s272 = sphi 0, %s256
    $region4: #{tpu_custom_call.1} parent=1 // loop_header_branch
      %26 = sbr.rel (%p24) target = $region8
    $region5: #{tpu_custom_call.1} parent=1 // loop_body
      %s28 = ssub.s32 %s23, 1
      %s29 = ssub.s32 %s23, 2
      %s36 = sadd.s32 1, %s31
      %p37 = scmp.ge.s32.totalorder %s36, 1
      %s38 = scalar_select %p37, 0, %s36
      %s39 = sadd.s32 1, %s30
      %s40 = scalar_select %p37, %s39, %s30
      %p41 = scmp.ge.s32.totalorder %s40, 2
      %s42 = scalar_select %p41, 0, %s40
      %s43 = ssub.s32 %s30, %s42
      %s44 = ssub.s32 %s31, %s38
      %s45 = sor.u32 %s43, %s44
      %p46 = scmp.eq.s32.totalorder %s45, 0
      %s48 = sadd.s32 %s47, 1
      %s49 = scalar_select %p46, %s47, %s48
      %p52 = pneg %p46
      %p53 = scmp.eq.s32.totalorder %s23, 1
      %p54 = por %p52, %p53
      %p55 = scmp.ne.s32.totalorder %s47, %s50
      %p56 = scmp.eq.s32.totalorder %s23, 0
      %p57 = por %p55, %p56
      %p58 = scmp.ne.s32.totalorder %s47, %s50
      %p59 = scmp.eq.s32.totalorder %s28, 1
      %p60 = por %p58, %p59
      %p61 = scmp.ne.s32.totalorder %s50, %s51
      %p62 = scmp.eq.s32.totalorder %s28, 0
      %p63 = por %p61, %p62
      %p64 = scmp.ne.s32.totalorder %s50, %s51
      %p65 = scmp.eq.s32.totalorder %s29, 1
      %p66 = por %p64, %p65
      %p68 = scmp.ne.s32.totalorder %s51, %s67
      %p69 = scmp.eq.s32.totalorder %s29, 0
      %p70 = por %p68, %p69
      %s71 = smul.u32 %s31, 8
      %s72 = ssub.s32 %s71, 1
      %p73 = scmp.gt.s32.totalorder %s72, 0
      %s74 = scalar_select %p73, %s72, 0
      %s75 = smul.u32 %s38, 8
      %s76 = ssub.s32 %s75, 1
      %p77 = scmp.gt.s32.totalorder %s76, 0
      %s78 = scalar_select %p77, %s76, 0
      %s79 = ssub.s32 %s30, %s42
      %s80 = ssub.s32 %s74, %s78
      %s81 = sor.u32 %s79, %s80
      %p82 = scmp.eq.s32.totalorder %s81, 0
      %s84 = sadd.s32 %s83, 1
      %s85 = scalar_select %p82, %s83, %s84
      %p88 = pneg %p82
      %p89 = scmp.eq.s32.totalorder %s23, 1
      %p90 = por %p88, %p89
      %p91 = scmp.ne.s32.totalorder %s83, %s86
      %p92 = scmp.eq.s32.totalorder %s23, 0
      %p93 = por %p91, %p92
      %p94 = scmp.ne.s32.totalorder %s83, %s86
      %p95 = scmp.eq.s32.totalorder %s28, 1
      %p96 = por %p94, %p95
      %p97 = scmp.ne.s32.totalorder %s86, %s87
      %p98 = scmp.eq.s32.totalorder %s28, 0
      %p99 = por %p97, %p98
      %p100 = scmp.ne.s32.totalorder %s86, %s87
      %p101 = scmp.eq.s32.totalorder %s29, 1
      %p102 = por %p100, %p101
      %p104 = scmp.ne.s32.totalorder %s87, %s103
      %p105 = scmp.eq.s32.totalorder %s29, 0
      %p106 = por %p104, %p105
      %s107 = sadd.s32 %s31, 1
      %s108 = smul.u32 %s107, 8
      %p109 = scmp.lt.s32.totalorder %s108, 7
      %s110 = scalar_select %p109, %s108, 7
      %s111 = sadd.s32 %s38, 1
      %s112 = smul.u32 %s111, 8
      %p113 = scmp.lt.s32.totalorder %s112, 7
      %s114 = scalar_select %p113, %s112, 7
      %s115 = ssub.s32 %s30, %s42
      %s116 = ssub.s32 %s110, %s114
      %s117 = sor.u32 %s115, %s116
      %p118 = scmp.eq.s32.totalorder %s117, 0
      %s120 = sadd.s32 %s119, 1
      %s121 = scalar_select %p118, %s119, %s120
      %p124 = pneg %p118
      %p125 = scmp.eq.s32.totalorder %s23, 1
      %p126 = por %p124, %p125
      %p127 = scmp.ne.s32.totalorder %s119, %s122
      %p128 = scmp.eq.s32.totalorder %s23, 0
      %p129 = por %p127, %p128
      %p130 = scmp.ne.s32.totalorder %s119, %s122
      %p131 = scmp.eq.s32.totalorder %s28, 1
      %p132 = por %p130, %p131
      %p133 = scmp.ne.s32.totalorder %s122, %s123
      %p134 = scmp.eq.s32.totalorder %s28, 0
      %p135 = por %p133, %p134
      %p136 = scmp.ne.s32.totalorder %s122, %s123
      %p137 = scmp.eq.s32.totalorder %s29, 1
      %p138 = por %p136, %p137
      %p140 = scmp.ne.s32.totalorder %s123, %s139
      %p141 = scmp.eq.s32.totalorder %s29, 0
      %p142 = por %p140, %p141
      %s144 = sadd.s32 %s143, 1
      %p147 = scmp.eq.s32.totalorder %s23, 1
      %p148 = scmp.ne.s32.totalorder %s143, %s145
      %p149 = scmp.eq.s32.totalorder %s23, 0
      %p150 = por %p148, %p149
      %p151 = scmp.ne.s32.totalorder %s143, %s145
      %p152 = scmp.eq.s32.totalorder %s28, 1
      %p153 = por %p151, %p152
      %p154 = scmp.ne.s32.totalorder %s145, %s146
      %p155 = scmp.eq.s32.totalorder %s28, 0
      %p156 = por %p154, %p155
      %p157 = scmp.ne.s32.totalorder %s145, %s146
      %p158 = scmp.eq.s32.totalorder %s29, 1
      %p159 = por %p157, %p158
      %p161 = scmp.ne.s32.totalorder %s146, %s160
      %p162 = scmp.eq.s32.totalorder %s29, 0
      %p163 = por %p161, %p162
      %s165 = sadd.s32 %s164, 1
      %p168 = scmp.eq.s32.totalorder %s23, 1
      %p169 = scmp.ne.s32.totalorder %s164, %s166
      %p170 = scmp.eq.s32.totalorder %s23, 0
      %p171 = por %p169, %p170
      %p172 = scmp.ne.s32.totalorder %s164, %s166
      %p173 = scmp.eq.s32.totalorder %s28, 1
      %p174 = por %p172, %p173
      %p175 = scmp.ne.s32.totalorder %s166, %s167
      %p176 = scmp.eq.s32.totalorder %s28, 0
      %p177 = por %p175, %p176
      %p178 = scmp.ne.s32.totalorder %s166, %s167
      %p179 = scmp.eq.s32.totalorder %s29, 1
      %p180 = por %p178, %p179
      %p182 = scmp.ne.s32.totalorder %s167, %s181
      %p183 = scmp.eq.s32.totalorder %s29, 0
      %p184 = por %p182, %p183
      %s186 = sadd.s32 %s185, 1
      %p189 = scmp.eq.s32.totalorder %s23, 1
      %p190 = scmp.ne.s32.totalorder %s185, %s187
      %p191 = scmp.eq.s32.totalorder %s23, 0
      %p192 = por %p190, %p191
      %p193 = scmp.ne.s32.totalorder %s185, %s187
      %p194 = scmp.eq.s32.totalorder %s28, 1
      %p195 = por %p193, %p194
      %p196 = scmp.ne.s32.totalorder %s187, %s188
      %p197 = scmp.eq.s32.totalorder %s28, 0
      %p198 = por %p196, %p197
      %p199 = scmp.ne.s32.totalorder %s187, %s188
      %p200 = scmp.eq.s32.totalorder %s29, 1
      %p201 = por %p199, %p200
      %p203 = scmp.ne.s32.totalorder %s188, %s202
      %p204 = scmp.eq.s32.totalorder %s29, 0
      %p205 = por %p203, %p204
      %s207 = sadd.s32 %s206, 1
      %p210 = scmp.eq.s32.totalorder %s23, 1
      %p211 = scmp.ne.s32.totalorder %s206, %s208
      %p212 = scmp.eq.s32.totalorder %s23, 0
      %p213 = por %p211, %p212
      %p214 = scmp.ne.s32.totalorder %s206, %s208
      %p215 = scmp.eq.s32.totalorder %s28, 1
      %p216 = por %p214, %p215
      %p217 = scmp.ne.s32.totalorder %s208, %s209
      %p218 = scmp.eq.s32.totalorder %s28, 0
      %p219 = por %p217, %p218
      %p220 = scmp.ne.s32.totalorder %s208, %s209
      %p221 = scmp.eq.s32.totalorder %s29, 1
      %p222 = por %p220, %p221
      %p224 = scmp.ne.s32.totalorder %s209, %s223
      %p225 = scmp.eq.s32.totalorder %s29, 0
      %p226 = por %p224, %p225
      %s228 = sadd.s32 %s227, 1
      %p231 = scmp.eq.s32.totalorder %s23, 1
      %p232 = scmp.ne.s32.totalorder %s227, %s229
      %p233 = scmp.eq.s32.totalorder %s23, 0
      %p234 = por %p232, %p233
      %p235 = scmp.ne.s32.totalorder %s227, %s229
      %p236 = scmp.eq.s32.totalorder %s28, 1
      %p237 = por %p235, %p236
      %p238 = scmp.ne.s32.totalorder %s229, %s230
      %p239 = scmp.eq.s32.totalorder %s28, 0
      %p240 = por %p238, %p239
      %p241 = scmp.ne.s32.totalorder %s229, %s230
      %p242 = scmp.eq.s32.totalorder %s29, 1
      %p243 = por %p241, %p242
      %p245 = scmp.ne.s32.totalorder %s230, %s244
      %p246 = scmp.eq.s32.totalorder %s29, 0
      %p247 = por %p245, %p246
      %s248 = ssub.s32 %s30, %s42
      %s249 = ssub.s32 %s31, %s38
      %s250 = sor.u32 %s248, %s249
      %p251 = scmp.eq.s32.totalorder %s250, 0
      %s253 = sadd.s32 %s252, 1
      %s254 = scalar_select %p251, %s252, %s253
      %p257 = pneg %p251
      %p258 = scmp.eq.s32.totalorder %s23, 1
      %p259 = por %p257, %p258
      %p260 = scmp.ne.s32.totalorder %s252, %s255
      %p261 = scmp.eq.s32.totalorder %s23, 0
      %p262 = por %p260, %p261
      %p263 = scmp.ne.s32.totalorder %s252, %s255
      %p264 = scmp.eq.s32.totalorder %s28, 1
      %p265 = por %p263, %p264
      %p266 = scmp.ne.s32.totalorder %s255, %s256
      %p267 = scmp.eq.s32.totalorder %s28, 0
      %p268 = por %p266, %p267
      %p269 = scmp.ne.s32.totalorder %s255, %s256
      %p270 = scmp.eq.s32.totalorder %s29, 1
      %p271 = por %p269, %p270
      %p273 = scmp.ne.s32.totalorder %s256, %s272
      %p274 = scmp.eq.s32.totalorder %s29, 0
      %p275 = por %p273, %p274
      %p276 = scmp.le.s32.totalorder 1, %s23
      %p277 = scmp.lt.s32.totalorder %s23, 3
      %p278 = pnand %p276, %p277
      %p279 = pneg %p278
      // Predicated region
      $region9: #{tpu_custom_call.1} parent=5 // pred_check
        _
      $region10: #{tpu_custom_call.1} parent=5 // pred_check_branch
        %281 = sbr.rel (%p278) target = $region12
      $region11: #{tpu_custom_call.1} parent=5 // pred_region
        %s282 = ssub.s32 %s23, 1
        // Predicated region
        $region13: #{tpu_custom_call.1} parent=11 // pred_check
          %p283 = pneg %p156
        $region14: #{tpu_custom_call.1} parent=11 // pred_check_branch
          %285 = sbr.rel (%p283) target = $region16
        $region15: #{tpu_custom_call.1} parent=11 // pred_region
          _
        $region16: #{tpu_custom_call.1} parent=11 // pred_fallthru
          _
        // Predicated region
        $region17: #{tpu_custom_call.1} parent=11 // pred_check
          %p286 = pneg %p177
        $region18: #{tpu_custom_call.1} parent=11 // pred_check_branch
          %288 = sbr.rel (%p286) target = $region20
        $region19: #{tpu_custom_call.1} parent=11 // pred_region
          _
        $region20: #{tpu_custom_call.1} parent=11 // pred_fallthru
          _
        // Predicated region
        $region21: #{tpu_custom_call.1} parent=11 // pred_check
          %p289 = pneg %p198
        $region22: #{tpu_custom_call.1} parent=11 // pred_check_branch
          %291 = sbr.rel (%p289) target = $region24
        $region23: #{tpu_custom_call.1} parent=11 // pred_region
          _
        $region24: #{tpu_custom_call.1} parent=11 // pred_fallthru
          _
        // Predicated region
        $region25: #{tpu_custom_call.1} parent=11 // pred_check
          %p292 = pneg %p219
        $region26: #{tpu_custom_call.1} parent=11 // pred_check_branch
          %294 = sbr.rel (%p292) target = $region28
        $region27: #{tpu_custom_call.1} parent=11 // pred_region
          _
        $region28: #{tpu_custom_call.1} parent=11 // pred_fallthru
          _
        // Predicated region
        $region29: #{tpu_custom_call.1} parent=11 // pred_check
          %p295 = pneg %p240
        $region30: #{tpu_custom_call.1} parent=11 // pred_check_branch
          %297 = sbr.rel (%p295) target = $region32
        $region31: #{tpu_custom_call.1} parent=11 // pred_region
          _
        $region32: #{tpu_custom_call.1} parent=11 // pred_fallthru
          _
      $region12: #{tpu_custom_call.1} parent=5 // pred_fallthru
        _
      %p298 = scmp.lt.s32.totalorder %s23, 2
      // Predicated region
      $region33: #{tpu_custom_call.1} parent=5 // pred_check
        %p299 = pneg %p298
      $region34: #{tpu_custom_call.1} parent=5 // pred_check_branch
        %301 = sbr.rel (%p299) target = $region36
      $region35: #{tpu_custom_call.1} parent=5 // pred_region
        // Predicated region
        $region37: #{tpu_custom_call.1} parent=35 // pred_check
          %p302 = pneg %p57
        $region38: #{tpu_custom_call.1} parent=35 // pred_check_branch
          %304 = sbr.rel (%p302) target = $region40
        $region39: #{tpu_custom_call.1} parent=35 // pred_region
          %s305 = sand.u32 %s47, 1
          %s306 = scalar_lea.sflag [#allocation4], %s305
          %s307 = sand.u32 %s47, 1
          %s308 = smul.addr %s307, 64
          %s309 = scalar_lea.vmem [#allocation3], %s308
          %s310 = smul.u32 8, %s31
          %312 = vsyncadd %s306, 0
          %s313 = smul.addr %s30, 8
          %s314 = sadd.s32 %s310, %s313
          %s315 = smul.addr %s314, 8
          %s316 = scalar_lea.hbm %s0, %s315
          %s317 = sshll.u32 %s316, 4
          %s318 = int_to_ptr.hbm [resolvable:$true] %s317
          %s319 = sshll.u32 %s309, 4
          %s320 = int_to_ptr.vmem [resolvable:$true] %s319
          %325 = dma.hbm_to_vmem [thread:$0]  %s318, 1024, %s320, %s306, 128, 128, 8
        $region40: #{tpu_custom_call.1} parent=35 // pred_fallthru
          _
        // Predicated region
        $region41: #{tpu_custom_call.1} parent=35 // pred_check
          %p326 = pneg %p93
        $region42: #{tpu_custom_call.1} parent=35 // pred_check_branch
          %328 = sbr.rel (%p326) target = $region44
        $region43: #{tpu_custom_call.1} parent=35 // pred_region
          %s329 = sand.u32 %s23, 1
          %s330 = scalar_lea.sflag [#allocation7], %s329
          %s331 = sand.u32 %s83, 1
          %s332 = smul.addr %s331, 8
          %s333 = scalar_lea.vmem [#allocation6], %s332
          %s334 = smul.u32 %s31, 8
          %s335 = ssub.s32 %s334, 1
          %p336 = scmp.gt.s32.totalorder %s335, 0
          %s337 = scalar_select %p336, %s335, 0
          %339 = vsyncadd %s330, 0
          %s340 = smul.addr %s30, 8
          %s341 = sadd.s32 %s337, %s340
          %s342 = smul.addr %s341, 8
          %s343 = scalar_lea.hbm %s1, %s342
          %s345 = sshll.u32 %s343, 4
          %s346 = int_to_ptr.hbm [resolvable:$true] %s345
          %s347 = sshll.u32 %s333, 4
          %s348 = int_to_ptr.vmem [resolvable:$true] %s347
          %350 = dma.hbm_to_vmem [thread:$0]  %s346, 128, %s348, %s330
        $region44: #{tpu_custom_call.1} parent=35 // pred_fallthru
          _
        // Predicated region
        $region45: #{tpu_custom_call.1} parent=35 // pred_check
          %p351 = pneg %p129
        $region46: #{tpu_custom_call.1} parent=35 // pred_check_branch
          %353 = sbr.rel (%p351) target = $region48
        $region47: #{tpu_custom_call.1} parent=35 // pred_region
          %s354 = sand.u32 %s23, 1
          %s355 = scalar_lea.sflag [#allocation7], %s354
          %s356 = sand.u32 %s119, 1
          %s357 = smul.addr %s356, 8
          %s358 = scalar_lea.vmem [#allocation8], %s357
          %s359 = sadd.s32 %s31, 1
          %s360 = smul.u32 %s359, 8
          %p361 = scmp.lt.s32.totalorder %s360, 7
          %s362 = scalar_select %p361, %s360, 7
          %364 = vsyncadd %s355, 0
          %s365 = smul.addr %s30, 8
          %s366 = sadd.s32 %s362, %s365
          %s367 = smul.addr %s366, 8
          %s368 = scalar_lea.hbm %s2, %s367
          %s370 = sshll.u32 %s368, 4
          %s371 = int_to_ptr.hbm [resolvable:$true] %s370
          %s372 = sshll.u32 %s358, 4
          %s373 = int_to_ptr.vmem [resolvable:$true] %s372
          %375 = dma.hbm_to_vmem [thread:$0]  %s371, 128, %s373, %s355
        $region48: #{tpu_custom_call.1} parent=35 // pred_fallthru
          _
      $region36: #{tpu_custom_call.1} parent=5 // pred_fallthru
        _
      %p376 = scmp.le.s32.totalorder 1, %s23
      %p377 = scmp.lt.s32.totalorder %s23, 3
      %p378 = pnand %p376, %p377
      %p379 = pneg %p378
      // Predicated region
      $region49: #{tpu_custom_call.1} parent=5 // pred_check
        _
      $region50: #{tpu_custom_call.1} parent=5 // pred_check_branch
        %381 = sbr.rel (%p378) target = $region52
      $region51: #{tpu_custom_call.1} parent=5 // pred_region
        %s382 = ssub.s32 %s23, 1
        %s383 = sand.u32 %s50, 1
        %s384 = scalar_lea.sflag [#allocation4], %s383
        %s385 = sand.u32 %s50, 1
        %s386 = smul.addr %s385, 64
        %s387 = scalar_lea.vmem [#allocation3], %s386
        // Predicated region
        $region53: #{tpu_custom_call.1} parent=51 // pred_check
          %p388 = pneg %p63
        $region54: #{tpu_custom_call.1} parent=51 // pred_check_branch
          %390 = sbr.rel (%p388) target = $region56
        $region55: #{tpu_custom_call.1} parent=51 // pred_region
          %392 = dma.done %s384, 1024
        $region56: #{tpu_custom_call.1} parent=51 // pred_fallthru
          _
        %s393 = sand.u32 %s28, 1
        %s394 = scalar_lea.sflag [#allocation7], %s393
        %s395 = sand.u32 %s86, 1
        %s396 = smul.addr %s395, 8
        %s397 = scalar_lea.vmem [#allocation6], %s396
        // Predicated region
        $region57: #{tpu_custom_call.1} parent=51 // pred_check
          %p398 = pneg %p99
        $region58: #{tpu_custom_call.1} parent=51 // pred_check_branch
          %400 = sbr.rel (%p398) target = $region60
        $region59: #{tpu_custom_call.1} parent=51 // pred_region
          %402 = dma.done %s394, 128
        $region60: #{tpu_custom_call.1} parent=51 // pred_fallthru
          _
        %s403 = sand.u32 %s28, 1
        %s404 = scalar_lea.sflag [#allocation7], %s403
        %s405 = sand.u32 %s122, 1
        %s406 = smul.addr %s405, 8
        %s407 = scalar_lea.vmem [#allocation8], %s406
        // Predicated region
        $region61: #{tpu_custom_call.1} parent=51 // pred_check
          %p408 = pneg %p135
        $region62: #{tpu_custom_call.1} parent=51 // pred_check_branch
          %410 = sbr.rel (%p408) target = $region64
        $region63: #{tpu_custom_call.1} parent=51 // pred_region
          %412 = dma.done %s404, 128
        $region64: #{tpu_custom_call.1} parent=51 // pred_fallthru
          _
        %s413 = sand.u32 %s50, 1
        %s414 = scalar_lea.sflag [#allocation4], %s413
        %s415 = sand.u32 %s50, 1
        %s416 = smul.addr %s415, 64
        %s417 = scalar_lea.vmem [#allocation3], %s416
        %p418 = pneg %p63
        %p419 = pneg %p60
        %s420 = sand.u32 %s28, 1
        %s421 = scalar_lea.sflag [#allocation7], %s420
        %s422 = sand.u32 %s86, 1
        %s423 = smul.addr %s422, 8
        %s424 = scalar_lea.vmem [#allocation6], %s423
        %p425 = pneg %p99
        %p426 = pneg %p96
        %s427 = sand.u32 %s28, 1
        %s428 = scalar_lea.sflag [#allocation7], %s427
        %s429 = sand.u32 %s122, 1
        %s430 = smul.addr %s429, 8
        %s431 = scalar_lea.vmem [#allocation8], %s430
        %p432 = pneg %p135
        %p433 = pneg %p132
        %p434 = pneg %p156
        %p435 = pneg %p153
        %p436 = pneg %p177
        %p437 = pneg %p174
        %p438 = pneg %p198
        %p439 = pneg %p195
        %p440 = pneg %p219
        %p441 = pneg %p216
        %p442 = pneg %p240
        %p443 = pneg %p237
        %p444 = pneg %p268
        %p445 = pneg %p265
        %s446 = sand.u32 %s255, 1
        %s447 = scalar_lea.sflag [#allocation5], %s446
        %s448 = sand.u32 %s255, 1
        %s449 = smul.addr %s448, 64
        %s450 = scalar_lea.vmem [#allocation9], %s449
        %s451 = smul.u32 8, %s33
        %s452 = smul.u32 %s33, 8
        %s453 = ssub.s32 %s452, 1
        %p454 = scmp.gt.s32.totalorder %s453, 0
        %s455 = scalar_select %p454, %s453, 0
        %s456 = sadd.s32 %s33, 1
        %s457 = smul.u32 %s456, 8
        %p458 = scmp.lt.s32.totalorder %s457, 7
        %s459 = scalar_select %p458, %s457, 7
        %s460 = smul.u32 8, %s33
        %v461 = vld [vmem:[%s3] sm:$0xff]
        %v462 = vld [vmem:[%s3 + $0x8] sm:$0xff]
        %v463 = vld [vmem:[%s4] sm:$0x1]
        %v464 = vld [vmem:[%s387] sm:$0xff]
        %v465 = vld [vmem:[%s387 + $0x8] sm:$0xff]
        %v466 = vld [vmem:[%s387 + $0x10] sm:$0xff]
        %v467 = vld [vmem:[%s387 + $0x18] sm:$0xff]
        %v468 = vld [vmem:[%s387 + $0x20] sm:$0xff]
        %v469 = vld [vmem:[%s387 + $0x28] sm:$0xff]
        %v470 = vld [vmem:[%s387 + $0x30] sm:$0xff]
        %v471 = vld [vmem:[%s387 + $0x38] sm:$0xff]
        %v473 = vperm.slane %v463, 0
        %vm475 = vcmask 130048
        %v477 = vsel %vm475, %v464, 0
        %v480 = vsel %vm475, %v465, 0
        %v483 = vsel %vm475, %v466, 0
        %v486 = vsel %vm475, %v467, 0
        %v489 = vsel %vm475, %v468, 0
        %v492 = vsel %vm475, %v469, 0
        %v495 = vsel %vm475, %v470, 0
        %v498 = vsel %vm475, %v471, 0
        %500 = vmatpush.msra.mxu0 0.0
        %501 = vmatpush.msra.mxu0 0.0
        %502 = vmatpush.msra.mxu0 0.0
        %503 = vmatpush.msra.mxu0 0.0
        %504 = vmatpush.msra.mxu0 0.0
        %505 = vmatpush.msra.mxu0 0.0
        %506 = vmatpush.msra.mxu0 0.0
        %507 = vmatpush.msra.mxu0 0.0
        %508 = vmatpush.msra.mxu0 0.0
        %509 = vmatpush.msra.mxu0 0.0
        %510 = vmatpush.msra.mxu0 0.0
        %511 = vmatpush.msra.mxu0 0.0
        %512 = vmatpush.msra.mxu0 0.0
        %513 = vmatpush.msra.mxu0 0.0
        %514 = vmatpush.msra.mxu0 %v462
        %515 = vmatpush.msra.mxu0 %v461
        %516 = vmatmul.f32.gmra.mxu0 %v477
        %v517 = vpop.f32.mrf.mxu0
        %v518 = vadd.f32 %v473, %v517
        %519 = vmatmul.f32.gmra.mxu0 %v480
        %v520 = vpop.f32.mrf.mxu0
        %v521 = vadd.f32 %v473, %v520
        %522 = vmatmul.f32.gmra.mxu0 %v483
        %v523 = vpop.f32.mrf.mxu0
        %v524 = vadd.f32 %v473, %v523
        %525 = vmatmul.f32.gmra.mxu0 %v486
        %v526 = vpop.f32.mrf.mxu0
        %v527 = vadd.f32 %v473, %v526
        %528 = vmatmul.f32.gmra.mxu0 %v489
        %v529 = vpop.f32.mrf.mxu0
        %v530 = vadd.f32 %v473, %v529
        %531 = vmatmul.f32.gmra.mxu0 %v492
        %v532 = vpop.f32.mrf.mxu0
        %v533 = vadd.f32 %v473, %v532
        %534 = vmatmul.f32.gmra.mxu0 %v495
        %v535 = vpop.f32.mrf.mxu0
        %v536 = vadd.f32 %v473, %v535
        %537 = vmatmul.f32.gmra.mxu0 %v498
        %v538 = vpop.f32.mrf.mxu0
        %v539 = vadd.f32 %v473, %v538
        %540 = vdwg.mxu0
        %vm541 = vcmp.gt.f32.partialorder %v518, 0.0
        %vm542 = vcmp.gt.f32.partialorder %v521, 0.0
        %vm543 = vcmp.gt.f32.partialorder %v524, 0.0
        %vm544 = vcmp.gt.f32.partialorder %v527, 0.0
        %vm545 = vcmp.gt.f32.partialorder %v530, 0.0
        %vm546 = vcmp.gt.f32.partialorder %v533, 0.0
        %vm547 = vcmp.gt.f32.partialorder %v536, 0.0
        %vm548 = vcmp.gt.f32.partialorder %v539, 0.0
        %v549 = vmul.f32 %v518, 0.01
        %v550 = vmul.f32 %v521, 0.01
        %v551 = vmul.f32 %v524, 0.01
        %v552 = vmul.f32 %v527, 0.01
        %v553 = vmul.f32 %v530, 0.01
        %v554 = vmul.f32 %v533, 0.01
        %v555 = vmul.f32 %v536, 0.01
        %v556 = vmul.f32 %v539, 0.01
        %v557 = vsel %vm541, %v518, %v549
        %v558 = vsel %vm542, %v521, %v550
        %v559 = vsel %vm543, %v524, %v551
        %v560 = vsel %vm544, %v527, %v552
        %v561 = vsel %vm545, %v530, %v553
        %v562 = vsel %vm546, %v533, %v554
        %v563 = vsel %vm547, %v536, %v555
        %v564 = vsel %vm548, %v539, %v556
        %v565 = vld [vmem:[%s397] sm:$0xff]
        %v567 = vsel %vm475, %v565, 0
        %569 = vmatpush.msra.mxu0 0.0
        %570 = vmatpush.msra.mxu0 0.0
        %571 = vmatpush.msra.mxu0 0.0
        %572 = vmatpush.msra.mxu0 0.0
        %573 = vmatpush.msra.mxu0 0.0
        %574 = vmatpush.msra.mxu0 0.0
        %575 = vmatpush.msra.mxu0 0.0
        %576 = vmatpush.msra.mxu0 0.0
        %577 = vmatpush.msra.mxu0 0.0
        %578 = vmatpush.msra.mxu0 0.0
        %579 = vmatpush.msra.mxu0 0.0
        %580 = vmatpush.msra.mxu0 0.0
        %581 = vmatpush.msra.mxu0 0.0
        %582 = vmatpush.msra.mxu0 0.0
        %583 = vmatpush.msra.mxu0 %v462
        %584 = vmatpush.msra.mxu0 %v461
        %585 = vmatmul.f32.gmra.mxu0 %v567
        %v586 = vpop.f32.mrf.mxu0
        %v587 = vadd.f32 %v473, %v586
        %588 = vdwg.mxu0
        %vm589 = vcmp.gt.f32.partialorder %v587, 0.0
        %v590 = vmul.f32 %v587, 0.01
        %v591 = vsel %vm589, %v587, %v590
        %v592 = vld [vmem:[%s407] sm:$0xff]
        %v594 = vsel %vm475, %v592, 0
        %596 = vmatpush.msra.mxu0 0.0
        %597 = vmatpush.msra.mxu0 0.0
        %598 = vmatpush.msra.mxu0 0.0
        %599 = vmatpush.msra.mxu0 0.0
        %600 = vmatpush.msra.mxu0 0.0
        %601 = vmatpush.msra.mxu0 0.0
        %602 = vmatpush.msra.mxu0 0.0
        %603 = vmatpush.msra.mxu0 0.0
        %604 = vmatpush.msra.mxu0 0.0
        %605 = vmatpush.msra.mxu0 0.0
        %606 = vmatpush.msra.mxu0 0.0
        %607 = vmatpush.msra.mxu0 0.0
        %608 = vmatpush.msra.mxu0 0.0
        %609 = vmatpush.msra.mxu0 0.0
        %610 = vmatpush.msra.mxu0 %v462
        %611 = vmatpush.msra.mxu0 %v461
        %612 = vmatmul.f32.gmra.mxu0 %v594
        %v613 = vpop.f32.mrf.mxu0
        %v614 = vadd.f32 %v473, %v613
        %615 = vdwg.mxu0
        %vm616 = vcmp.gt.f32.partialorder %v614, 0.0
        %v617 = vmul.f32 %v614, 0.01
        %v618 = vsel %vm616, %v614, %v617
        %p619 = scmp.eq.s32.totalorder %s33, 0
        %s620 = scalar_select %p619, 0.0, 1.0
        %v621 = vstv %s620
        %v622 = vmul.f32 %v591, %v621
        %v623 = vmul.f32 %v618, %v621
        %vm624 = vcmask 24576
        %625 = vst.msk [vmem:[#allocation2] sm:$0x1] %vm624, 0.0
        %626 = vst.msk [vmem:[#allocation2 + $0x10] sm:$0x1] %vm624, 0.0
        %627 = vst.msk [vmem:[#allocation2 + $0x20] sm:$0x1] %vm624, 0.0
        %628 = vst.msk [vmem:[#allocation2 + $0x30] sm:$0x1] %vm624, 0.0
        %629 = vst.msk [vmem:[#allocation2 + $0x40] sm:$0x1] %vm624, 0.0
        %630 = vst.msk [vmem:[#allocation2 + $0x50] sm:$0x1] %vm624, 0.0
        %631 = vst.msk [vmem:[#allocation2 + $0x60] sm:$0x1] %vm624, 0.0
        %632 = vst.msk [vmem:[#allocation2 + $0x70] sm:$0x1] %vm624, 0.0
        %633 = vst.msk [vmem:[#allocation2 + $0x80] sm:$0x1] %vm624, 0.0
        %634 = vst.msk [vmem:[#allocation2 + $0x90] sm:$0x1] %vm624, 0.0
        %635 = vst.msk [vmem:[#allocation2 + $0x9] sm:$0x1] %vm624, 0.0
        %636 = vst.msk [vmem:[#allocation2 + $0x19] sm:$0x1] %vm624, 0.0
        %637 = vst.msk [vmem:[#allocation2 + $0x29] sm:$0x1] %vm624, 0.0
        %638 = vst.msk [vmem:[#allocation2 + $0x39] sm:$0x1] %vm624, 0.0
        %639 = vst.msk [vmem:[#allocation2 + $0x49] sm:$0x1] %vm624, 0.0
        %640 = vst.msk [vmem:[#allocation2 + $0x59] sm:$0x1] %vm624, 0.0
        %641 = vst.msk [vmem:[#allocation2 + $0x69] sm:$0x1] %vm624, 0.0
        %642 = vst.msk [vmem:[#allocation2 + $0x79] sm:$0x1] %vm624, 0.0
        %643 = vst.msk [vmem:[#allocation2 + $0x89] sm:$0x1] %vm624, 0.0
        %644 = vst.msk [vmem:[#allocation2 + $0x99] sm:$0x1] %vm624, 0.0
        %vm645 = vcmask 31744
        %646 = vst.msk [vmem:[#allocation2 + $0x1] sm:$0xff] %vm645, %v622
        %s647 = scalar_lea.vmem [#allocation2], 16
        %648 = vst.msk [vmem:[%s647 + $0x1] sm:$0xff] %vm645, %v557
        %649 = vst.msk [vmem:[%s647 + $0x11] sm:$0xff] %vm645, %v558
        %650 = vst.msk [vmem:[%s647 + $0x21] sm:$0xff] %vm645, %v559
        %651 = vst.msk [vmem:[%s647 + $0x31] sm:$0xff] %vm645, %v560
        %652 = vst.msk [vmem:[%s647 + $0x41] sm:$0xff] %vm645, %v561
        %653 = vst.msk [vmem:[%s647 + $0x51] sm:$0xff] %vm645, %v562
        %654 = vst.msk [vmem:[%s647 + $0x61] sm:$0xff] %vm645, %v563
        %655 = vst.msk [vmem:[%s647 + $0x71] sm:$0xff] %vm645, %v564
        %s656 = scalar_lea.vmem [#allocation2], 144
        %657 = vst.msk [vmem:[%s656 + $0x1] sm:$0xff] %vm645, %v623
        %v658 = vld [vmem:[%s5] sm:$0x7]
        %v659 = vld [vmem:[%s5 + $0x4] sm:$0x7]
        %v660 = vld [vmem:[%s5 + $0x8] sm:$0x7]
        %v661 = vld [vmem:[#allocation2] sm:$0xff]
        %v662 = vld [vmem:[#allocation2 + $0x10] sm:$0xff]
        %v663 = vld [vmem:[#allocation2 + $0x20] sm:$0xff]
        %v664 = vld [vmem:[#allocation2 + $0x30] sm:$0xff]
        %v665 = vld [vmem:[#allocation2 + $0x40] sm:$0xff]
        %v666 = vld [vmem:[#allocation2 + $0x50] sm:$0xff]
        %v667 = vld [vmem:[#allocation2 + $0x60] sm:$0xff]
        %v668 = vld [vmem:[#allocation2 + $0x70] sm:$0xff]
        %v669 = vperm.slane %v658, 0
        %v670 = vmul.f32 %v661, %v669
        %v671 = vmul.f32 %v662, %v669
        %v672 = vmul.f32 %v663, %v669
        %v673 = vmul.f32 %v664, %v669
        %v674 = vmul.f32 %v665, %v669
        %v675 = vmul.f32 %v666, %v669
        %v676 = vmul.f32 %v667, %v669
        %v677 = vmul.f32 %v668, %v669
        %v678 = vld [vmem:[#allocation2 + $0x1] sm:$0xff]
        %v679 = vld [vmem:[#allocation2 + $0x11] sm:$0xff]
        %v680 = vld [vmem:[#allocation2 + $0x21] sm:$0xff]
        %v681 = vld [vmem:[#allocation2 + $0x31] sm:$0xff]
        %v682 = vld [vmem:[#allocation2 + $0x41] sm:$0xff]
        %v683 = vld [vmem:[#allocation2 + $0x51] sm:$0xff]
        %v684 = vld [vmem:[#allocation2 + $0x61] sm:$0xff]
        %v685 = vld [vmem:[#allocation2 + $0x71] sm:$0xff]
        %v686 = vperm.slane %v658, 1
        %v687 = vmul.f32 %v678, %v686
        %v688 = vmul.f32 %v679, %v686
        %v689 = vmul.f32 %v680, %v686
        %v690 = vmul.f32 %v681, %v686
        %v691 = vmul.f32 %v682, %v686
        %v692 = vmul.f32 %v683, %v686
        %v693 = vmul.f32 %v684, %v686
        %v694 = vmul.f32 %v685, %v686
        %v695 = vadd.f32 %v670, %v687
        %v696 = vadd.f32 %v671, %v688
        %v697 = vadd.f32 %v672, %v689
        %v698 = vadd.f32 %v673, %v690
        %v699 = vadd.f32 %v674, %v691
        %v700 = vadd.f32 %v675, %v692
        %v701 = vadd.f32 %v676, %v693
        %v702 = vadd.f32 %v677, %v694
        %v703 = vld [vmem:[#allocation2 + $0x2] sm:$0xff]
        %v704 = vld [vmem:[#allocation2 + $0x12] sm:$0xff]
        %v705 = vld [vmem:[#allocation2 + $0x22] sm:$0xff]
        %v706 = vld [vmem:[#allocation2 + $0x32] sm:$0xff]
        %v707 = vld [vmem:[#allocation2 + $0x42] sm:$0xff]
        %v708 = vld [vmem:[#allocation2 + $0x52] sm:$0xff]
        %v709 = vld [vmem:[#allocation2 + $0x62] sm:$0xff]
        %v710 = vld [vmem:[#allocation2 + $0x72] sm:$0xff]
        %v711 = vperm.slane %v658, 2
        %v712 = vmul.f32 %v703, %v711
        %v713 = vmul.f32 %v704, %v711
        %v714 = vmul.f32 %v705, %v711
        %v715 = vmul.f32 %v706, %v711
        %v716 = vmul.f32 %v707, %v711
        %v717 = vmul.f32 %v708, %v711
        %v718 = vmul.f32 %v709, %v711
        %v719 = vmul.f32 %v710, %v711
        %v720 = vadd.f32 %v695, %v712
        %v721 = vadd.f32 %v696, %v713
        %v722 = vadd.f32 %v697, %v714
        %v723 = vadd.f32 %v698, %v715
        %v724 = vadd.f32 %v699, %v716
        %v725 = vadd.f32 %v700, %v717
        %v726 = vadd.f32 %v701, %v718
        %v727 = vadd.f32 %v702, %v719
        %v728 = vld [vmem:[%s647] sm:$0xff]
        %v729 = vld [vmem:[%s647 + $0x10] sm:$0xff]
        %v730 = vld [vmem:[%s647 + $0x20] sm:$0xff]
        %v731 = vld [vmem:[%s647 + $0x30] sm:$0xff]
        %v732 = vld [vmem:[%s647 + $0x40] sm:$0xff]
        %v733 = vld [vmem:[%s647 + $0x50] sm:$0xff]
        %v734 = vld [vmem:[%s647 + $0x60] sm:$0xff]
        %v735 = vld [vmem:[%s647 + $0x70] sm:$0xff]
        %v736 = vperm.slane %v659, 0
        %v737 = vmul.f32 %v728, %v736
        %v738 = vmul.f32 %v729, %v736
        %v739 = vmul.f32 %v730, %v736
        %v740 = vmul.f32 %v731, %v736
        %v741 = vmul.f32 %v732, %v736
        %v742 = vmul.f32 %v733, %v736
        %v743 = vmul.f32 %v734, %v736
        %v744 = vmul.f32 %v735, %v736
        %v745 = vadd.f32 %v720, %v737
        %v746 = vadd.f32 %v721, %v738
        %v747 = vadd.f32 %v722, %v739
        %v748 = vadd.f32 %v723, %v740
        %v749 = vadd.f32 %v724, %v741
        %v750 = vadd.f32 %v725, %v742
        %v751 = vadd.f32 %v726, %v743
        %v752 = vadd.f32 %v727, %v744
        %v753 = vld [vmem:[%s647 + $0x1] sm:$0xff]
        %v754 = vld [vmem:[%s647 + $0x11] sm:$0xff]
        %v755 = vld [vmem:[%s647 + $0x21] sm:$0xff]
        %v756 = vld [vmem:[%s647 + $0x31] sm:$0xff]
        %v757 = vld [vmem:[%s647 + $0x41] sm:$0xff]
        %v758 = vld [vmem:[%s647 + $0x51] sm:$0xff]
        %v759 = vld [vmem:[%s647 + $0x61] sm:$0xff]
        %v760 = vld [vmem:[%s647 + $0x71] sm:$0xff]
        %v761 = vperm.slane %v659, 1
        %v762 = vmul.f32 %v753, %v761
        %v763 = vmul.f32 %v754, %v761
        %v764 = vmul.f32 %v755, %v761
        %v765 = vmul.f32 %v756, %v761
        %v766 = vmul.f32 %v757, %v761
        %v767 = vmul.f32 %v758, %v761
        %v768 = vmul.f32 %v759, %v761
        %v769 = vmul.f32 %v760, %v761
        %v770 = vadd.f32 %v745, %v762
        %v771 = vadd.f32 %v746, %v763
        %v772 = vadd.f32 %v747, %v764
        %v773 = vadd.f32 %v748, %v765
        %v774 = vadd.f32 %v749, %v766
        %v775 = vadd.f32 %v750, %v767
        %v776 = vadd.f32 %v751, %v768
        %v777 = vadd.f32 %v752, %v769
        %v778 = vld [vmem:[%s647 + $0x2] sm:$0xff]
        %v779 = vld [vmem:[%s647 + $0x12] sm:$0xff]
        %v780 = vld [vmem:[%s647 + $0x22] sm:$0xff]
        %v781 = vld [vmem:[%s647 + $0x32] sm:$0xff]
        %v782 = vld [vmem:[%s647 + $0x42] sm:$0xff]
        %v783 = vld [vmem:[%s647 + $0x52] sm:$0xff]
        %v784 = vld [vmem:[%s647 + $0x62] sm:$0xff]
        %v785 = vld [vmem:[%s647 + $0x72] sm:$0xff]
        %v786 = vperm.slane %v659, 2
        %v787 = vmul.f32 %v778, %v786
        %v788 = vmul.f32 %v779, %v786
        %v789 = vmul.f32 %v780, %v786
        %v790 = vmul.f32 %v781, %v786
        %v791 = vmul.f32 %v782, %v786
        %v792 = vmul.f32 %v783, %v786
        %v793 = vmul.f32 %v784, %v786
        %v794 = vmul.f32 %v785, %v786
        %v795 = vadd.f32 %v770, %v787
        %v796 = vadd.f32 %v771, %v788
        %v797 = vadd.f32 %v772, %v789
        %v798 = vadd.f32 %v773, %v790
        %v799 = vadd.f32 %v774, %v791
        %v800 = vadd.f32 %v775, %v792
        %v801 = vadd.f32 %v776, %v793
        %v802 = vadd.f32 %v777, %v794
        %s803 = scalar_lea.vmem [#allocation2], 32
        %v804 = vld [vmem:[%s803] sm:$0xff]
        %v805 = vld [vmem:[%s803 + $0x10] sm:$0xff]
        %v806 = vld [vmem:[%s803 + $0x20] sm:$0xff]
        %v807 = vld [vmem:[%s803 + $0x30] sm:$0xff]
        %v808 = vld [vmem:[%s803 + $0x40] sm:$0xff]
        %v809 = vld [vmem:[%s803 + $0x50] sm:$0xff]
        %v810 = vld [vmem:[%s803 + $0x60] sm:$0xff]
        %v811 = vld [vmem:[%s803 + $0x70] sm:$0xff]
        %v812 = vperm.slane %v660, 0
        %v813 = vmul.f32 %v804, %v812
        %v814 = vmul.f32 %v805, %v812
        %v815 = vmul.f32 %v806, %v812
        %v816 = vmul.f32 %v807, %v812
        %v817 = vmul.f32 %v808, %v812
        %v818 = vmul.f32 %v809, %v812
        %v819 = vmul.f32 %v810, %v812
        %v820 = vmul.f32 %v811, %v812
        %v821 = vadd.f32 %v795, %v813
        %v822 = vadd.f32 %v796, %v814
        %v823 = vadd.f32 %v797, %v815
        %v824 = vadd.f32 %v798, %v816
        %v825 = vadd.f32 %v799, %v817
        %v826 = vadd.f32 %v800, %v818
        %v827 = vadd.f32 %v801, %v819
        %v828 = vadd.f32 %v802, %v820
        %v829 = vld [vmem:[%s803 + $0x1] sm:$0xff]
        %v830 = vld [vmem:[%s803 + $0x11] sm:$0xff]
        %v831 = vld [vmem:[%s803 + $0x21] sm:$0xff]
        %v832 = vld [vmem:[%s803 + $0x31] sm:$0xff]
        %v833 = vld [vmem:[%s803 + $0x41] sm:$0xff]
        %v834 = vld [vmem:[%s803 + $0x51] sm:$0xff]
        %v835 = vld [vmem:[%s803 + $0x61] sm:$0xff]
        %v836 = vld [vmem:[%s803 + $0x71] sm:$0xff]
        %v837 = vperm.slane %v660, 1
        %v838 = vmul.f32 %v829, %v837
        %v839 = vmul.f32 %v830, %v837
        %v840 = vmul.f32 %v831, %v837
        %v841 = vmul.f32 %v832, %v837
        %v842 = vmul.f32 %v833, %v837
        %v843 = vmul.f32 %v834, %v837
        %v844 = vmul.f32 %v835, %v837
        %v845 = vmul.f32 %v836, %v837
        %v846 = vadd.f32 %v821, %v838
        %v847 = vadd.f32 %v822, %v839
        %v848 = vadd.f32 %v823, %v840
        %v849 = vadd.f32 %v824, %v841
        %v850 = vadd.f32 %v825, %v842
        %v851 = vadd.f32 %v826, %v843
        %v852 = vadd.f32 %v827, %v844
        %v853 = vadd.f32 %v828, %v845
        %v854 = vld [vmem:[%s803 + $0x2] sm:$0xff]
        %v855 = vld [vmem:[%s803 + $0x12] sm:$0xff]
        %v856 = vld [vmem:[%s803 + $0x22] sm:$0xff]
        %v857 = vld [vmem:[%s803 + $0x32] sm:$0xff]
        %v858 = vld [vmem:[%s803 + $0x42] sm:$0xff]
        %v859 = vld [vmem:[%s803 + $0x52] sm:$0xff]
        %v860 = vld [vmem:[%s803 + $0x62] sm:$0xff]
        %v861 = vld [vmem:[%s803 + $0x72] sm:$0xff]
        %v862 = vperm.slane %v660, 2
        %v863 = vmul.f32 %v854, %v862
        %v864 = vmul.f32 %v855, %v862
        %v865 = vmul.f32 %v856, %v862
        %v866 = vmul.f32 %v857, %v862
        %v867 = vmul.f32 %v858, %v862
        %v868 = vmul.f32 %v859, %v862
        %v869 = vmul.f32 %v860, %v862
        %v870 = vmul.f32 %v861, %v862
        %v871 = vadd.f32 %v846, %v863
        %v872 = vadd.f32 %v847, %v864
        %v873 = vadd.f32 %v848, %v865
        %v874 = vadd.f32 %v849, %v866
        %v875 = vadd.f32 %v850, %v867
        %v876 = vadd.f32 %v851, %v868
        %v877 = vadd.f32 %v852, %v869
        %v878 = vadd.f32 %v853, %v870
        %v879 = vld [vmem:[%s6] sm:$0xf]
        %v880 = vld [vmem:[%s7] sm:$0x1]
        %v882 = vperm.slane %v880, 0
        %v885 = vsel %vm645, %v871, 0
        %v888 = vsel %vm645, %v872, 0
        %v891 = vsel %vm645, %v873, 0
        %v894 = vsel %vm645, %v874, 0
        %v897 = vsel %vm645, %v875, 0
        %v900 = vsel %vm645, %v876, 0
        %v903 = vsel %vm645, %v877, 0
        %v906 = vsel %vm645, %v878, 0
        %vm908 = vcmask 1043456
        %v910 = vsel %vm908, %v879, 0
        %912 = vmatpush.msra.mxu0 0.0
        %913 = vmatpush.msra.mxu0 0.0
        %914 = vmatpush.msra.mxu0 0.0
        %915 = vmatpush.msra.mxu0 0.0
        %916 = vmatpush.msra.mxu0 0.0
        %917 = vmatpush.msra.mxu0 0.0
        %918 = vmatpush.msra.mxu0 0.0
        %919 = vmatpush.msra.mxu0 0.0
        %920 = vmatpush.msra.mxu0 0.0
        %921 = vmatpush.msra.mxu0 0.0
        %922 = vmatpush.msra.mxu0 0.0
        %923 = vmatpush.msra.mxu0 0.0
        %924 = vmatpush.msra.mxu0 0.0
        %925 = vmatpush.msra.mxu0 0.0
        %926 = vmatpush.msra.mxu0 0.0
        %927 = vmatpush.msra.mxu0 %v910
        %928 = vmatmul.f32.gmra.mxu0 %v885
        %v929 = vpop.f32.mrf.mxu0
        %v930 = vadd.f32 %v882, %v929
        %931 = vmatmul.f32.gmra.mxu0 %v888
        %v932 = vpop.f32.mrf.mxu0
        %v933 = vadd.f32 %v882, %v932
        %934 = vmatmul.f32.gmra.mxu0 %v891
        %v935 = vpop.f32.mrf.mxu0
        %v936 = vadd.f32 %v882, %v935
        %937 = vmatmul.f32.gmra.mxu0 %v894
        %v938 = vpop.f32.mrf.mxu0
        %v939 = vadd.f32 %v882, %v938
        %940 = vmatmul.f32.gmra.mxu0 %v897
        %v941 = vpop.f32.mrf.mxu0
        %v942 = vadd.f32 %v882, %v941
        %943 = vmatmul.f32.gmra.mxu0 %v900
        %v944 = vpop.f32.mrf.mxu0
        %v945 = vadd.f32 %v882, %v944
        %946 = vmatmul.f32.gmra.mxu0 %v903
        %v947 = vpop.f32.mrf.mxu0
        %v948 = vadd.f32 %v882, %v947
        %949 = vmatmul.f32.gmra.mxu0 %v906
        %v950 = vpop.f32.mrf.mxu0
        %v951 = vadd.f32 %v882, %v950
        %952 = vdwg.mxu0
        %vm953 = vcmask 64512
        %954 = vst.msk [vmem:[%s450] sm:$0xff] %vm953, %v930
        %955 = vst.msk [vmem:[%s450 + $0x8] sm:$0xff] %vm953, %v933
        %956 = vst.msk [vmem:[%s450 + $0x10] sm:$0xff] %vm953, %v936
        %957 = vst.msk [vmem:[%s450 + $0x18] sm:$0xff] %vm953, %v939
        %958 = vst.msk [vmem:[%s450 + $0x20] sm:$0xff] %vm953, %v942
        %959 = vst.msk [vmem:[%s450 + $0x28] sm:$0xff] %vm953, %v945
        %960 = vst.msk [vmem:[%s450 + $0x30] sm:$0xff] %vm953, %v948
        %961 = vst.msk [vmem:[%s450 + $0x38] sm:$0xff] %vm953, %v951
        %s962 = sand.u32 %s255, 1
        %s963 = scalar_lea.sflag [#allocation5], %s962
        %s964 = sand.u32 %s255, 1
        %s965 = smul.addr %s964, 64
        %s966 = scalar_lea.vmem [#allocation9], %s965
        // Predicated region
        $region65: #{tpu_custom_call.1} parent=51 // pred_check
          %p967 = pneg %p265
        $region66: #{tpu_custom_call.1} parent=51 // pred_check_branch
          %969 = sbr.rel (%p967) target = $region68
        $region67: #{tpu_custom_call.1} parent=51 // pred_region
          %s970 = smul.u32 8, %s33
          %972 = vsyncadd %s963, 0
          %s973 = smul.addr %s32, 8
          %s974 = sadd.s32 %s970, %s973
          %s975 = smul.addr %s974, 8
          %s976 = scalar_lea.hbm %s8, %s975
          %s977 = sshll.u32 %s966, 4
          %s978 = int_to_ptr.vmem [resolvable:$true] %s977
          %s979 = sshll.u32 %s976, 4
          %s980 = int_to_ptr.hbm [resolvable:$true] %s979
          %985 = dma.vmem_to_hbm [thread:$0]  %s978, 1024, %s980, %s963, 128, 128, 8
        $region68: #{tpu_custom_call.1} parent=51 // pred_fallthru
          _
      $region52: #{tpu_custom_call.1} parent=5 // pred_fallthru
        _
      %p986 = scmp.le.s32.totalorder 2, %s23
      // Predicated region
      $region69: #{tpu_custom_call.1} parent=5 // pred_check
        %p987 = pneg %p986
      $region70: #{tpu_custom_call.1} parent=5 // pred_check_branch
        %989 = sbr.rel (%p987) target = $region72
      $region71: #{tpu_custom_call.1} parent=5 // pred_region
        %s990 = ssub.s32 %s23, 2
        // Predicated region
        $region73: #{tpu_custom_call.1} parent=71 // pred_check
          %p991 = pneg %p271
        $region74: #{tpu_custom_call.1} parent=71 // pred_check_branch
          %993 = sbr.rel (%p991) target = $region76
        $region75: #{tpu_custom_call.1} parent=71 // pred_region
          %s994 = sand.u32 %s256, 1
          %s995 = scalar_lea.sflag [#allocation5], %s994
          %s996 = sand.u32 %s256, 1
          %s997 = smul.addr %s996, 64
          %s998 = scalar_lea.vmem [#allocation9], %s997
          %1000 = dma.done %s995, 1024
        $region76: #{tpu_custom_call.1} parent=71 // pred_fallthru
          _
      $region72: #{tpu_custom_call.1} parent=5 // pred_fallthru
        _
    $region6: #{tpu_custom_call.1} parent=1 // loop_footer
      %s27 = sadd.s32 1, %s23
    $region7: #{tpu_custom_call.1} parent=1 // loop_footer_branch
      %22 = sbr.rel target = $region3
    $region8: #{tpu_custom_call.1} parent=1 // loop_exit
      _
    %1001 = vsyncpa [#allocation4], 1
    %s1002 = scalar_lea.sflag [#allocation4], 1
    %1003 = vsyncpa %s1002, 1
    %1004 = vsyncpa [#allocation7], 1
    %s1005 = scalar_lea.sflag [#allocation7], 1
    %1006 = vsyncpa %s1005, 1
    %1007 = vsyncpa [#allocation5], 1
    %s1008 = scalar_lea.sflag [#allocation5], 1
    %1009 = vsyncpa %s1008, 1

</llo_original>
